<compile_context>
chip_gen: v5e
topology: v5e:2x2
jax: 0.10.0
libtpu: 0.0.40
codegen_flags: <defaults>
</compile_context>

<pallas_src>
import numpy as np
import jax
import jax.numpy as jnp
from jax.experimental import pallas as pl
from jax.experimental.pallas import tpu as pltpu

EPS = 1e-8


def _round_up(x, m):
    return (x + m - 1) // m * m


def _softplus(x):
    # Numerically stable softplus (log1p(exp(x)) overflows for large x).
    return jnp.maximum(x, 0.0) + jnp.log1p(jnp.exp(-jnp.abs(x)))


def _pick_tile(n, candidates=(512, 256, 128)):
    for cand in candidates:
        if n % cand == 0:
            return cand
    return 128


# ---------------------------------------------------------------------------
# Pallas kernel 1: reparameterized sampling of weight and bias.
#   w = w_mu + (softplus(w_sig) + eps) * w_noise        (written in (K, Cout))
#   b = b_mu + (softplus(b_sig) + eps) * b_noise
# Inputs are already laid out as (K_pad, Cout_pad) / (1, Cout_pad) so the
# kernel is purely elementwise and its output feeds the matmul directly.
# ---------------------------------------------------------------------------
def _sample_kernel(wmu_ref, wsig_ref, wnoise_ref,
                   bmu_ref, bsig_ref, bnoise_ref,
                   w_ref, b_ref):
    w_std = _softplus(wsig_ref[...]) + EPS
    w_ref[...] = wmu_ref[...] + w_std * wnoise_ref[...]

    # Bias output block is resident across the (arbitrary) grid axis; write
    # it once on the first step instead of redundantly every iteration.
    @pl.when(pl.program_id(0) == 0)
    def _():
        b_std = _softplus(bsig_ref[...]) + EPS
        b_ref[...] = bmu_ref[...] + b_std * bnoise_ref[...]


def sample_weight_bias(wmu_t, wsig_t, wnoise_t, bmu_r, bsig_r, bnoise_r):
    """wmu_t/wsig_t/wnoise_t: (K_pad, Cout_pad); b*: (1, Cout_pad)."""
    K_pad, Cout_pad = wmu_t.shape
    tkr = _pick_tile(K_pad)                       # K_pad is 128-aligned

    w_spec = pl.BlockSpec((tkr, Cout_pad), lambda i: (i, 0))
    b_spec = pl.BlockSpec((1, Cout_pad), lambda i: (0, 0))

    w_t, b_row = pl.pallas_call(
        _sample_kernel,
        out_shape=(jax.ShapeDtypeStruct((K_pad, Cout_pad), jnp.float32),
                   jax.ShapeDtypeStruct((1, Cout_pad), jnp.float32)),
        grid_spec=pltpu.PrefetchScalarGridSpec(
            num_scalar_prefetch=0,
            grid=(K_pad // tkr,),
            in_specs=[w_spec, w_spec, w_spec, b_spec, b_spec, b_spec],
            out_specs=(w_spec, b_spec),
        ),
        compiler_params=pltpu.CompilerParams(
            dimension_semantics=("arbitrary",)),
    )(wmu_t, wsig_t, wnoise_t, bmu_r, bsig_r, bnoise_r)
    return w_t, b_row


# ---------------------------------------------------------------------------
# Pallas kernel 2: conv-as-matmul over im2col patches, bias fused.
#   out[m, co] = sum_k patches[m, k] * weight_t[k, co] + bias[co]
# Grid = (M tiles "parallel", K tiles "arbitrary"), f32 VMEM accumulator.
# ---------------------------------------------------------------------------
def _conv_matmul_kernel(p_ref, w_ref, b_ref, o_ref, acc_ref):
    k = pl.program_id(1)

    @pl.when(k == 0)
    def _():
        acc_ref[...] = jnp.zeros_like(acc_ref)

    acc_ref[...] += jnp.dot(p_ref[...], w_ref[...],
                            preferred_element_type=jnp.float32)

    @pl.when(k == pl.num_programs(1) - 1)
    def _():
        o_ref[...] = (acc_ref[...] + b_ref[...]).astype(o_ref.dtype)


def _vmem_need_bytes(tm, tk, Cout_pad):
    # Double-buffered ins/outs + accumulator, f32 bytes (conservative).
    return 4 * (2 * tm * tk + 2 * tk * Cout_pad + 2 * Cout_pad
                + 2 * tm * Cout_pad + tm * Cout_pad)


def _choose_tm(M, tk, Cout_pad, *, target=512, budget_bytes=20 << 20):
    tm = target
    # Keep at least 2 M tiles when possible so the megacore can split the grid.
    while tm > 128 and pl.cdiv(M, tm) < 2:
        tm //= 2
    while tm > 128 and _vmem_need_bytes(tm, tk, Cout_pad) > budget_bytes:
        tm //= 2
    return max(tm, 128)


def conv_matmul(patches, weight_t, bias_row):
    """patches: (M_pad, K_pad), weight_t: (K_pad, Cout_pad), bias: (1, Cout_pad)."""
    M_pad, K_pad = patches.shape
    K_pad_w, Cout_pad = weight_t.shape
    assert K_pad == K_pad_w
    tk = _pick_tile(K_pad)
    tm = _pick_tile(M_pad, (512, 256, 128))
    # Respect the VMEM budget / megacore split rules.
    tm = min(tm, _choose_tm(M_pad, tk, Cout_pad, target=tm))
    assert M_pad % tm == 0

    vmem_need = _vmem_need_bytes(tm, tk, Cout_pad)
    vmem_limit = int(min(48 << 20, max(16 << 20, 2 * vmem_need)))

    return pl.pallas_call(
        _conv_matmul_kernel,
        out_shape=jax.ShapeDtypeStruct((M_pad, Cout_pad), jnp.float32),
        grid_spec=pltpu.PrefetchScalarGridSpec(
            num_scalar_prefetch=0,
            grid=(M_pad // tm, K_pad // tk),
            in_specs=[
                pl.BlockSpec((tm, tk), lambda i, k: (i, k)),
                pl.BlockSpec((tk, Cout_pad), lambda i, k: (k, 0)),
                pl.BlockSpec((1, Cout_pad), lambda i, k: (0, 0)),
            ],
            out_specs=pl.BlockSpec((tm, Cout_pad), lambda i, k: (i, 0)),
            scratch_shapes=[pltpu.VMEM((tm, Cout_pad), jnp.float32)],
        ),
        compiler_params=pltpu.CompilerParams(
            dimension_semantics=("parallel", "arbitrary"),
            vmem_limit_bytes=vmem_limit),
    )(patches, weight_t, bias_row)


# ---------------------------------------------------------------------------
# Glue: im2col built in NHWC order -> patches land directly in (M, K) layout
# with K ordered as (kh, kw, cin); no full-size transpose of the patch array.
# ---------------------------------------------------------------------------
def im2col_nhwc(x_nchw, kh, kw, stride, padding):
    N, C, H, W = x_nchw.shape
    x = jnp.transpose(x_nchw, (0, 2, 3, 1))  # NHWC (small transpose of input)
    xp = jnp.pad(x, ((0, 0), (padding, padding), (padding, padding), (0, 0)))
    Ho = (H + 2 * padding - kh) // stride + 1
    Wo = (W + 2 * padding - kw) // stride + 1
    cols = []
    for i in range(kh):
        for j in range(kw):
            cols.append(xp[:, i:i + Ho * stride:stride,
                           j:j + Wo * stride:stride, :])
    patches = jnp.concatenate(cols, axis=-1)        # (N, Ho, Wo, kh*kw*C)
    return patches.reshape(N * Ho * Wo, kh * kw * C), Ho, Wo


# ---------------------------------------------------------------------------
# BayesConv forward (sample=True path).
# ---------------------------------------------------------------------------
def bayes_conv_forward(x, params, kernel, stride, padding, w_noise, b_noise,
                       compute_dtype=jnp.float32):
    Cout, Cin, KH, KW = params["q_weight_mu"].shape
    K = Cin * KH * KW
    K_pad = _round_up(K, 128)
    Cout_pad = _round_up(Cout, 128)

    w_sig = params["q_weight_sig"]
    if w_sig.ndim == 2:  # share_std_channel=True variant
        w_sig = jnp.broadcast_to(w_sig[:, :, None, None], (Cout, Cin, KH, KW))

    def to_kxc(a):
        # (Cout, Cin, KH, KW) -> (K_pad, Cout_pad), K ordered (kh, kw, cin).
        a = jnp.transpose(a, (2, 3, 1, 0)).reshape(K, Cout)
        return jnp.pad(a, ((0, K_pad - K), (0, Cout_pad - Cout)))

    def to_row(a):
        return jnp.pad(a, (0, Cout_pad - Cout)).reshape(1, Cout_pad)

    # Sample weight/bias with the Pallas kernel, already in matmul layout.
    w_t, b_row = sample_weight_bias(
        to_kxc(params["q_weight_mu"]), to_kxc(w_sig), to_kxc(w_noise),
        to_row(params["q_bias_mu"]), to_row(params["q_bias_sig"]),
        to_row(b_noise))

    # Conv via im2col + Pallas matmul (lane-dense padded M / K / Cout).
    patches, Ho, Wo = im2col_nhwc(x, KH, KW, stride, padding)   # (M, K)
    M = patches.shape[0]
    tk = _pick_tile(K_pad)
    tm = _choose_tm(M, tk, Cout_pad)
    M_pad = _round_up(M, tm)
    if M_pad != M or K_pad != K:
        patches = jnp.pad(patches, ((0, M_pad - M), (0, K_pad - K)))

    if compute_dtype != jnp.float32:
        # bf16 MXU operands (recommended on v6e/v7x when accuracy allows);
        # accumulation and bias stay f32 inside the kernel.
        patches_c = patches.astype(compute_dtype)
        w_c = w_t.astype(compute_dtype)
    else:
        patches_c, w_c = patches, w_t

    out_flat = conv_matmul(patches_c, w_c, b_row)   # (M_pad, Cout_pad) f32
    out_flat = out_flat[:M, :Cout]

    N = x.shape[0]
    out = out_flat.reshape(N, Ho, Wo, Cout).transpose(0, 3, 1, 2)

    # Recover sampled weight/bias in module layout (OIHW / (Cout,)).
    weight = (w_t[:K, :Cout].reshape(KH, KW, Cin, Cout)
              .transpose(3, 2, 0, 1))
    bias = b_row[0, :Cout]
    return out, weight, bias


if __name__ == "__main__":
    # Module config (share_std_channel=False, posterior_std=0.001).
    in_channels, out_channels = 4, 8
    kernel, stride, padding = (3, 3), 1, 1
    posterior_std = 0.001
    N, H, W = 2, 16, 16

    key = jax.random.PRNGKey(0)
    k_x, k_wmu, k_wn, k_bn = jax.random.split(key, 4)

    # Deterministic parameter init (mirrors initialize_posterior_params).
    std_proxy = float(np.log(np.exp(posterior_std) - 1.0))
    params = {
        "q_weight_mu": jax.random.uniform(
            k_wmu, (out_channels, in_channels, *kernel),
            minval=-0.2, maxval=0.2, dtype=jnp.float32),
        "q_weight_sig": jnp.full(
            (out_channels, in_channels, *kernel), std_proxy, jnp.float32),
        "q_bias_mu": jnp.zeros((out_channels,), jnp.float32),
        "q_bias_sig": jnp.full((out_channels,), std_proxy, jnp.float32),
    }

    # Input (NCHW) and reparameterization noise (deterministic).
    x = jax.random.normal(k_x, (N, in_channels, H, W), jnp.float32)
    w_noise = jax.random.normal(
        k_wn, (out_channels, in_channels, *kernel), jnp.float32)
    b_noise = jax.random.normal(k_bn, (out_channels,), jnp.float32)

    out, weight, bias = bayes_conv_forward(
        x, params, kernel, stride, padding, w_noise, b_noise)
    out = jax.block_until_ready(out)

    # Check the Pallas-sampled weight/bias against a plain-JAX reparameterization.
    w_ref = params["q_weight_mu"] + (
        jax.nn.softplus(params["q_weight_sig"]) + EPS) * w_noise
    b_ref = params["q_bias_mu"] + (
        jax.nn.softplus(params["q_bias_sig"]) + EPS) * b_noise
    np.testing.assert_allclose(np.asarray(weight), np.asarray(w_ref),
                               rtol=1e-5, atol=1e-6)
    np.testing.assert_allclose(np.asarray(bias), np.asarray(b_ref),
                               rtol=1e-5, atol=1e-6)

    # Reference check against XLA conv with the same sampled weight/bias.
    ref = jax.lax.conv_general_dilated(
        x, weight, window_strides=(stride, stride),
        padding=((padding, padding), (padding, padding)),
        dimension_numbers=("NCHW", "OIHW", "NCHW")) + bias.reshape(1, -1, 1, 1)
    assert out.shape == (N, out_channels, H, W)
    np.testing.assert_allclose(np.asarray(out), np.asarray(ref),
                               rtol=1e-4, atol=1e-4)

    print("KERNEL_OK")
</pallas_src>

<mosaic_0001>
module attributes {stable_mosaic.version = 11 : i64} {
  func.func @_sample_kernel(%arg0: i32, %arg1: memref<128x128xf32, #tpu.memory_space<vmem>>, %arg2: memref<128x128xf32, #tpu.memory_space<vmem>>, %arg3: memref<128x128xf32, #tpu.memory_space<vmem>>, %arg4: memref<1x128xf32, #tpu.memory_space<vmem>>, %arg5: memref<1x128xf32, #tpu.memory_space<vmem>>, %arg6: memref<1x128xf32, #tpu.memory_space<vmem>>, %arg7: memref<128x128xf32, #tpu.memory_space<vmem>>, %arg8: memref<1x128xf32, #tpu.memory_space<vmem>>) attributes {dimension_semantics = [#tpu.dimension_semantics<arbitrary>], iteration_bounds = array<i64: 1>, scalar_prefetch = 0 : i64, scratch_operands = 0 : i64, tpu.core_type = #tpu.core_type<tc>, window_params = [{transform_indices = @transform_0, window_bounds = array<i64: 128, 128>}, {transform_indices = @transform_1, window_bounds = array<i64: 128, 128>}, {transform_indices = @transform_2, window_bounds = array<i64: 128, 128>}, {pipeline_mode = #tpu.pipeline_mode<synchronous>, transform_indices = @transform_3, window_bounds = array<i64: 1, 128>}, {pipeline_mode = #tpu.pipeline_mode<synchronous>, transform_indices = @transform_4, window_bounds = array<i64: 1, 128>}, {pipeline_mode = #tpu.pipeline_mode<synchronous>, transform_indices = @transform_5, window_bounds = array<i64: 1, 128>}, {transform_indices = @transform_6, window_bounds = array<i64: 128, 128>}, {pipeline_mode = #tpu.pipeline_mode<synchronous>, transform_indices = @transform_7, window_bounds = array<i64: 1, 128>}]} {
    %c0 = arith.constant 0 : index
    %c0_0 = arith.constant 0 : index
    %0 = vector.load %arg2[%c0, %c0_0] : memref<128x128xf32, #tpu.memory_space<vmem>>, vector<128x128xf32>
    %cst = arith.constant 0.000000e+00 : f32
    %1 = vector.broadcast %cst : f32 to vector<128x128xf32>
    %2 = arith.maximumf %0, %1 : vector<128x128xf32>
    %3 = math.absf %0 : vector<128x128xf32>
    %cst_1 = arith.constant 0.000000e+00 : f32
    %4 = vector.broadcast %cst_1 : f32 to vector<128x128xf32>
    %5 = arith.subf %4, %3 : vector<128x128xf32>
    %6 = math.exp %5 : vector<128x128xf32>
    %7 = math.log1p %6 : vector<128x128xf32>
    %8 = arith.addf %2, %7 : vector<128x128xf32>
    %cst_2 = arith.constant 9.99999993E-9 : f32
    %9 = vector.broadcast %cst_2 : f32 to vector<128x128xf32>
    %10 = arith.addf %8, %9 : vector<128x128xf32>
    %c0_3 = arith.constant 0 : index
    %c0_4 = arith.constant 0 : index
    %11 = vector.load %arg1[%c0_3, %c0_4] : memref<128x128xf32, #tpu.memory_space<vmem>>, vector<128x128xf32>
    %c0_5 = arith.constant 0 : index
    %c0_6 = arith.constant 0 : index
    %12 = vector.load %arg3[%c0_5, %c0_6] : memref<128x128xf32, #tpu.memory_space<vmem>>, vector<128x128xf32>
    %13 = arith.mulf %10, %12 : vector<128x128xf32>
    %14 = arith.addf %11, %13 : vector<128x128xf32>
    %c0_7 = arith.constant 0 : index
    %c0_8 = arith.constant 0 : index
    %15 = vector.load %arg7[%c0_7, %c0_8] : memref<128x128xf32, #tpu.memory_space<vmem>>, vector<128x128xf32>
    tpu.vector_store %arg7[%c0_7, %c0_8], %14 {strides = array<i32>} : memref<128x128xf32, #tpu.memory_space<vmem>>, vector<128x128xf32>,
    %c0_i32 = arith.constant 0 : i32
    %16 = arith.cmpi eq, %arg0, %c0_i32 : i32
    %17 = arith.extui %16 : i1 to i32
    %c0_i32_9 = arith.constant 0 : i32
    %18 = arith.cmpi ne, %17, %c0_i32_9 : i32
    scf.if %18 {
      %c0_10 = arith.constant 0 : index
      %c0_11 = arith.constant 0 : index
      %19 = vector.load %arg5[%c0_10, %c0_11] : memref<1x128xf32, #tpu.memory_space<vmem>>, vector<1x128xf32>
      %cst_12 = arith.constant 0.000000e+00 : f32
      %20 = vector.broadcast %cst_12 : f32 to vector<1x128xf32>
      %21 = arith.maximumf %19, %20 : vector<1x128xf32>
      %22 = math.absf %19 : vector<1x128xf32>
      %cst_13 = arith.constant 0.000000e+00 : f32
      %23 = vector.broadcast %cst_13 : f32 to vector<1x128xf32>
      %24 = arith.subf %23, %22 : vector<1x128xf32>
      %25 = math.exp %24 : vector<1x128xf32>
      %26 = math.log1p %25 : vector<1x128xf32>
      %27 = arith.addf %21, %26 : vector<1x128xf32>
      %cst_14 = arith.constant 9.99999993E-9 : f32
      %28 = vector.broadcast %cst_14 : f32 to vector<1x128xf32>
      %29 = arith.addf %27, %28 : vector<1x128xf32>
      %c0_15 = arith.constant 0 : index
      %c0_16 = arith.constant 0 : index
      %30 = vector.load %arg4[%c0_15, %c0_16] : memref<1x128xf32, #tpu.memory_space<vmem>>, vector<1x128xf32>
      %c0_17 = arith.constant 0 : index
      %c0_18 = arith.constant 0 : index
      %31 = vector.load %arg6[%c0_17, %c0_18] : memref<1x128xf32, #tpu.memory_space<vmem>>, vector<1x128xf32>
      %32 = arith.mulf %29, %31 : vector<1x128xf32>
      %33 = arith.addf %30, %32 : vector<1x128xf32>
      %c0_19 = arith.constant 0 : index
      %c0_20 = arith.constant 0 : index
      %34 = vector.load %arg8[%c0_19, %c0_20] : memref<1x128xf32, #tpu.memory_space<vmem>>, vector<1x128xf32>
      tpu.vector_store %arg8[%c0_19, %c0_20], %33 {strides = array<i32>} : memref<1x128xf32, #tpu.memory_space<vmem>>, vector<1x128xf32>,
    } else {
    }
    return
  }
  func.func @transform_0(%arg0: i32) -> (i32, i32) {
    %c0_i32 = arith.constant 0 : i32
    %c0_i32_0 = arith.constant 0 : i32
    return %arg0, %c0_i32 : i32, i32
  }
  func.func @transform_1(%arg0: i32) -> (i32, i32) {
    %c0_i32 = arith.constant 0 : i32
    %c0_i32_0 = arith.constant 0 : i32
    return %arg0, %c0_i32 : i32, i32
  }
  func.func @transform_2(%arg0: i32) -> (i32, i32) {
    %c0_i32 = arith.constant 0 : i32
    %c0_i32_0 = arith.constant 0 : i32
    return %arg0, %c0_i32 : i32, i32
  }
  func.func @transform_3(%arg0: i32) -> (i32, i32) {
    %c0_i32 = arith.constant 0 : i32
    %c0_i32_0 = arith.constant 0 : i32
    %c0_i32_1 = arith.constant 0 : i32
    return %c0_i32, %c0_i32_0 : i32, i32
  }
  func.func @transform_4(%arg0: i32) -> (i32, i32) {
    %c0_i32 = arith.constant 0 : i32
    %c0_i32_0 = arith.constant 0 : i32
    %c0_i32_1 = arith.constant 0 : i32
    return %c0_i32, %c0_i32_0 : i32, i32
  }
  func.func @transform_5(%arg0: i32) -> (i32, i32) {
    %c0_i32 = arith.constant 0 : i32
    %c0_i32_0 = arith.constant 0 : i32
    %c0_i32_1 = arith.constant 0 : i32
    return %c0_i32, %c0_i32_0 : i32, i32
  }
  func.func @transform_6(%arg0: i32) -> (i32, i32) {
    %c0_i32 = arith.constant 0 : i32
    %c0_i32_0 = arith.constant 0 : i32
    return %arg0, %c0_i32 : i32, i32
  }
  func.func @transform_7(%arg0: i32) -> (i32, i32) {
    %c0_i32 = arith.constant 0 : i32
    %c0_i32_0 = arith.constant 0 : i32
    %c0_i32_1 = arith.constant 0 : i32
    return %c0_i32, %c0_i32_0 : i32, i32
  }
}

</mosaic_0001>

<llo_original>
// kernel: tpu_custom_call.1
$region0: #{tpu_custom_call.1}
  #allocation0 [shape = 'u32[]', space=smem, size = 0x4, offset = 0x4, fixed_abs, tag = 'smem constant byte address 0x4 - core index']
  #allocation1 [shape = 'u32[72,128]{1,0:T(1,128)}', space=vmem, size = 0x9000, scoped, tag = 'internal scratch']
  %s0 = inlined_call_operand.hbm [shape: f32[128,128], index: 0, kind: input, shape index: {}]
  %s1 = inlined_call_operand.hbm [shape: f32[128,128], index: 1, kind: input, shape index: {}]
  %s2 = inlined_call_operand.hbm [shape: f32[128,128], index: 2, kind: input, shape index: {}]
  %s3 = inlined_call_operand.vmem [shape: f32[1,128], index: 3, kind: input, shape index: {}]
  %s4 = inlined_call_operand.vmem [shape: f32[1,128], index: 4, kind: input, shape index: {}]
  %s5 = inlined_call_operand.vmem [shape: f32[1,128], index: 5, kind: input, shape index: {}]
  %s6 = inlined_call_operand.hbm [shape: f32[128,128], index: 6, kind: output, shape index: {0}]
  %s7 = inlined_call_operand.hbm [shape: f32[1,128], index: 7, kind: output, shape index: {1}]
  %8 = xla_tuple %s6, %s7
  %s9 = sld [smem:[#allocation0]]
  $region58: #{tpu_custom_call.1} parent=0
    _
  %s11 = ssub.s32 1, %s9
  %s12 = scalar_select 0, %s11, %s9
  $region1: #{tpu_custom_call.1} parent=0
    #allocation2 [shape = 'u8[65536]{0}', space=vmem, size = 0x10000, scoped, tag = 'input window, operand 0, single buffered']
    #allocation3 [shape = 's32[1]{0}', space=sflag, size = 0x4, scoped, tag = 'scoped memory for tpu_custom_call.1']
    #allocation4 [shape = 's32[1]{0}', space=sflag, size = 0x4, scoped, tag = 'scoped memory for tpu_custom_call.1']
    #allocation5 [shape = 'u8[65536]{0}', space=vmem, size = 0x10000, scoped, tag = 'input window, operand 1, single buffered']
    #allocation6 [shape = 's32[1]{0}', space=sflag, size = 0x4, scoped, tag = 'scoped memory for tpu_custom_call.1']
    #allocation7 [shape = 'u8[65536]{0}', space=vmem, size = 0x10000, scoped, tag = 'input window, operand 2, single buffered']
    #allocation8 [shape = 'u8[65536]{0}', space=vmem, size = 0x10000, scoped, tag = 'output window, operand 0, single buffered']
    #allocation9 [shape = 'u8[512]{0}', space=vmem, size = 0x400, scoped, tag = 'output window, operand 1, single buffered']
    #allocation10 [shape = 's32[1]{0}', space=sflag, size = 0x4, scoped, tag = 'scoped memory for tpu_custom_call.1']
    %13 = vsyncpa [#allocation3], 0
    %14 = vsyncpa [#allocation6], 0
    %15 = vsyncpa [#allocation4], 0
    %16 = vsyncpa [#allocation10], 0
    // Predicated region
    $region2: #{tpu_custom_call.1} parent=1 // pred_check
      _
    $region3: #{tpu_custom_call.1} parent=1 // pred_check_branch
      %18 = sbr.rel (0) target = $region5
    $region4: #{tpu_custom_call.1} parent=1 // pred_region
      %20 = vsyncadd [#allocation3], 0
      %s21 = sshll.u32 %s0, 4
      %s22 = int_to_ptr.hbm [resolvable:$true] %s21
      %s23 = sshll.u32 [#allocation2], 4
      %s24 = int_to_ptr.vmem [resolvable:$true] %s23
      %29 = dma.hbm_to_vmem [thread:$0]  %s22, 2048, %s24, [#allocation3], 128, 128, 8
    $region5: #{tpu_custom_call.1} parent=1 // pred_fallthru
      _
    // Predicated region
    $region6: #{tpu_custom_call.1} parent=1 // pred_check
      _
    $region7: #{tpu_custom_call.1} parent=1 // pred_check_branch
      %31 = sbr.rel (0) target = $region9
    $region8: #{tpu_custom_call.1} parent=1 // pred_region
      %33 = vsyncadd [#allocation6], 0
      %s34 = sshll.u32 %s1, 4
      %s35 = int_to_ptr.hbm [resolvable:$true] %s34
      %s36 = sshll.u32 [#allocation5], 4
      %s37 = int_to_ptr.vmem [resolvable:$true] %s36
      %42 = dma.hbm_to_vmem [thread:$0]  %s35, 2048, %s37, [#allocation6], 128, 128, 8
    $region9: #{tpu_custom_call.1} parent=1 // pred_fallthru
      _
    // Predicated region
    $region10: #{tpu_custom_call.1} parent=1 // pred_check
      _
    $region11: #{tpu_custom_call.1} parent=1 // pred_check_branch
      %44 = sbr.rel (0) target = $region13
    $region12: #{tpu_custom_call.1} parent=1 // pred_region
      %46 = vsyncadd [#allocation6], 0
      %s47 = sshll.u32 %s2, 4
      %s48 = int_to_ptr.hbm [resolvable:$true] %s47
      %s49 = sshll.u32 [#allocation7], 4
      %s50 = int_to_ptr.vmem [resolvable:$true] %s49
      %55 = dma.hbm_to_vmem [thread:$0]  %s48, 2048, %s50, [#allocation6], 128, 128, 8
    $region13: #{tpu_custom_call.1} parent=1 // pred_fallthru
      _
    // Predicated region
    $region14: #{tpu_custom_call.1} parent=1 // pred_check
      _
    $region15: #{tpu_custom_call.1} parent=1 // pred_check_branch
      %57 = sbr.rel (0) target = $region17
    $region16: #{tpu_custom_call.1} parent=1 // pred_region
      _
    $region17: #{tpu_custom_call.1} parent=1 // pred_fallthru
      _
    // Predicated region
    $region18: #{tpu_custom_call.1} parent=1 // pred_check
      _
    $region19: #{tpu_custom_call.1} parent=1 // pred_check_branch
      %59 = sbr.rel (0) target = $region21
    $region20: #{tpu_custom_call.1} parent=1 // pred_region
      _
    $region21: #{tpu_custom_call.1} parent=1 // pred_fallthru
      _
    // Predicated region
    $region22: #{tpu_custom_call.1} parent=1 // pred_check
      _
    $region23: #{tpu_custom_call.1} parent=1 // pred_check_branch
      %61 = sbr.rel (0) target = $region25
    $region24: #{tpu_custom_call.1} parent=1 // pred_region
      _
    $region25: #{tpu_custom_call.1} parent=1 // pred_fallthru
      _
    // Predicated region
    $region26: #{tpu_custom_call.1} parent=1 // pred_check
      _
    $region27: #{tpu_custom_call.1} parent=1 // pred_check_branch
      %63 = sbr.rel (0) target = $region29
    $region28: #{tpu_custom_call.1} parent=1 // pred_region
      %65 = dma.done [#allocation3], 2048
    $region29: #{tpu_custom_call.1} parent=1 // pred_fallthru
      _
    // Predicated region
    $region30: #{tpu_custom_call.1} parent=1 // pred_check
      _
    $region31: #{tpu_custom_call.1} parent=1 // pred_check_branch
      %67 = sbr.rel (0) target = $region33
    $region32: #{tpu_custom_call.1} parent=1 // pred_region
      %69 = dma.done [#allocation6], 2048
    $region33: #{tpu_custom_call.1} parent=1 // pred_fallthru
      _
    // Predicated region
    $region34: #{tpu_custom_call.1} parent=1 // pred_check
      _
    $region35: #{tpu_custom_call.1} parent=1 // pred_check_branch
      %71 = sbr.rel (0) target = $region37
    $region36: #{tpu_custom_call.1} parent=1 // pred_region
      %73 = dma.done [#allocation6], 2048
    $region37: #{tpu_custom_call.1} parent=1 // pred_fallthru
      _
    %v74 = vld [vmem:[#allocation5] sm:$0xff]
    %v75 = vld [vmem:[#allocation5 + $0x8] sm:$0xff]
    %v76 = vld [vmem:[#allocation5 + $0x10] sm:$0xff]
    %v77 = vld [vmem:[#allocation5 + $0x18] sm:$0xff]
    %v78 = vld [vmem:[#allocation5 + $0x20] sm:$0xff]
    %v79 = vld [vmem:[#allocation5 + $0x28] sm:$0xff]
    %v80 = vld [vmem:[#allocation5 + $0x30] sm:$0xff]
    %v81 = vld [vmem:[#allocation5 + $0x38] sm:$0xff]
    %v82 = vld [vmem:[#allocation5 + $0x40] sm:$0xff]
    %v83 = vld [vmem:[#allocation5 + $0x48] sm:$0xff]
    %v84 = vld [vmem:[#allocation5 + $0x50] sm:$0xff]
    %v85 = vld [vmem:[#allocation5 + $0x58] sm:$0xff]
    %v86 = vld [vmem:[#allocation5 + $0x60] sm:$0xff]
    %v87 = vld [vmem:[#allocation5 + $0x68] sm:$0xff]
    %v88 = vld [vmem:[#allocation5 + $0x70] sm:$0xff]
    %v89 = vld [vmem:[#allocation5 + $0x78] sm:$0xff]
    %v90 = vmax.f32 %v74, 0.0
    %v91 = vmax.f32 %v75, 0.0
    %v92 = vmax.f32 %v76, 0.0
    %v93 = vmax.f32 %v77, 0.0
    %v94 = vmax.f32 %v78, 0.0
    %v95 = vmax.f32 %v79, 0.0
    %v96 = vmax.f32 %v80, 0.0
    %v97 = vmax.f32 %v81, 0.0
    %v98 = vmax.f32 %v82, 0.0
    %v99 = vmax.f32 %v83, 0.0
    %v100 = vmax.f32 %v84, 0.0
    %v101 = vmax.f32 %v85, 0.0
    %v102 = vmax.f32 %v86, 0.0
    %v103 = vmax.f32 %v87, 0.0
    %v104 = vmax.f32 %v88, 0.0
    %v105 = vmax.f32 %v89, 0.0
    %v106 = vand.u32 2147483647, %v74
    %v107 = vand.u32 2147483647, %v75
    %v108 = vand.u32 2147483647, %v76
    %v109 = vand.u32 2147483647, %v77
    %v110 = vand.u32 2147483647, %v78
    %v111 = vand.u32 2147483647, %v79
    %v112 = vand.u32 2147483647, %v80
    %v113 = vand.u32 2147483647, %v81
    %v114 = vand.u32 2147483647, %v82
    %v115 = vand.u32 2147483647, %v83
    %v116 = vand.u32 2147483647, %v84
    %v117 = vand.u32 2147483647, %v85
    %v118 = vand.u32 2147483647, %v86
    %v119 = vand.u32 2147483647, %v87
    %v120 = vand.u32 2147483647, %v88
    %v121 = vand.u32 2147483647, %v89
    %v122 = vsub.f32 0.0, %v106
    %v123 = vsub.f32 0.0, %v107
    %v124 = vsub.f32 0.0, %v108
    %v125 = vsub.f32 0.0, %v109
    %v126 = vsub.f32 0.0, %v110
    %v127 = vsub.f32 0.0, %v111
    %v128 = vsub.f32 0.0, %v112
    %v129 = vsub.f32 0.0, %v113
    %v130 = vsub.f32 0.0, %v114
    %v131 = vsub.f32 0.0, %v115
    %v132 = vsub.f32 0.0, %v116
    %v133 = vsub.f32 0.0, %v117
    %v134 = vsub.f32 0.0, %v118
    %v135 = vsub.f32 0.0, %v119
    %v136 = vsub.f32 0.0, %v120
    %v137 = vsub.f32 0.0, %v121
    %v138 = vmul.f32 %v122, 1.442695
    %v139 = vpow.pop %v138
    %v140 = vmul.f32 %v123, 1.442695
    %v141 = vpow.pop %v140
    %v142 = vmul.f32 %v124, 1.442695
    %v143 = vpow.pop %v142
    %v144 = vmul.f32 %v125, 1.442695
    %v145 = vpow.pop %v144
    %v146 = vmul.f32 %v126, 1.442695
    %v147 = vpow.pop %v146
    %v148 = vmul.f32 %v127, 1.442695
    %v149 = vpow.pop %v148
    %v150 = vmul.f32 %v128, 1.442695
    %v151 = vpow.pop %v150
    %v152 = vmul.f32 %v129, 1.442695
    %v153 = vpow.pop %v152
    %v154 = vmul.f32 %v130, 1.442695
    %v155 = vpow.pop %v154
    %v156 = vmul.f32 %v131, 1.442695
    %v157 = vpow.pop %v156
    %v158 = vmul.f32 %v132, 1.442695
    %v159 = vpow.pop %v158
    %v160 = vmul.f32 %v133, 1.442695
    %v161 = vpow.pop %v160
    %v162 = vmul.f32 %v134, 1.442695
    %v163 = vpow.pop %v162
    %v164 = vmul.f32 %v135, 1.442695
    %v165 = vpow.pop %v164
    %v166 = vmul.f32 %v136, 1.442695
    %v167 = vpow.pop %v166
    %v168 = vmul.f32 %v137, 1.442695
    %v169 = vpow.pop %v168
    %v170 = vadd.f32 %v139, 1.0
    %v171 = vlog2.pop %v170
    %v172 = vmul.f32 %v171, 0.6931472
    %v173 = vmul.f32 -0.5, %v139
    %v174 = vadd.f32 %v173, 1.0
    %v175 = vmul.f32 %v174, %v139
    %v176 = vand.u32 2147483647, %v139
    %vm177 = vcmp.lt.f32.partialorder %v176, 0.0004427343
    %v178 = vsel %vm177, %v175, %v172
    %v179 = vadd.f32 %v141, 1.0
    %v180 = vlog2.pop %v179
    %v181 = vmul.f32 %v180, 0.6931472
    %v182 = vmul.f32 -0.5, %v141
    %v183 = vadd.f32 %v182, 1.0
    %v184 = vmul.f32 %v183, %v141
    %v185 = vand.u32 2147483647, %v141
    %vm186 = vcmp.lt.f32.partialorder %v185, 0.0004427343
    %v187 = vsel %vm186, %v184, %v181
    %v188 = vadd.f32 %v143, 1.0
    %v189 = vlog2.pop %v188
    %v190 = vmul.f32 %v189, 0.6931472
    %v191 = vmul.f32 -0.5, %v143
    %v192 = vadd.f32 %v191, 1.0
    %v193 = vmul.f32 %v192, %v143
    %v194 = vand.u32 2147483647, %v143
    %vm195 = vcmp.lt.f32.partialorder %v194, 0.0004427343
    %v196 = vsel %vm195, %v193, %v190
    %v197 = vadd.f32 %v145, 1.0
    %v198 = vlog2.pop %v197
    %v199 = vmul.f32 %v198, 0.6931472
    %v200 = vmul.f32 -0.5, %v145
    %v201 = vadd.f32 %v200, 1.0
    %v202 = vmul.f32 %v201, %v145
    %v203 = vand.u32 2147483647, %v145
    %vm204 = vcmp.lt.f32.partialorder %v203, 0.0004427343
    %v205 = vsel %vm204, %v202, %v199
    %v206 = vadd.f32 %v147, 1.0
    %v207 = vlog2.pop %v206
    %v208 = vmul.f32 %v207, 0.6931472
    %v209 = vmul.f32 -0.5, %v147
    %v210 = vadd.f32 %v209, 1.0
    %v211 = vmul.f32 %v210, %v147
    %v212 = vand.u32 2147483647, %v147
    %vm213 = vcmp.lt.f32.partialorder %v212, 0.0004427343
    %v214 = vsel %vm213, %v211, %v208
    %v215 = vadd.f32 %v149, 1.0
    %v216 = vlog2.pop %v215
    %v217 = vmul.f32 %v216, 0.6931472
    %v218 = vmul.f32 -0.5, %v149
    %v219 = vadd.f32 %v218, 1.0
    %v220 = vmul.f32 %v219, %v149
    %v221 = vand.u32 2147483647, %v149
    %vm222 = vcmp.lt.f32.partialorder %v221, 0.0004427343
    %v223 = vsel %vm222, %v220, %v217
    %v224 = vadd.f32 %v151, 1.0
    %v225 = vlog2.pop %v224
    %v226 = vmul.f32 %v225, 0.6931472
    %v227 = vmul.f32 -0.5, %v151
    %v228 = vadd.f32 %v227, 1.0
    %v229 = vmul.f32 %v228, %v151
    %v230 = vand.u32 2147483647, %v151
    %vm231 = vcmp.lt.f32.partialorder %v230, 0.0004427343
    %v232 = vsel %vm231, %v229, %v226
    %v233 = vadd.f32 %v153, 1.0
    %v234 = vlog2.pop %v233
    %v235 = vmul.f32 %v234, 0.6931472
    %v236 = vmul.f32 -0.5, %v153
    %v237 = vadd.f32 %v236, 1.0
    %v238 = vmul.f32 %v237, %v153
    %v239 = vand.u32 2147483647, %v153
    %vm240 = vcmp.lt.f32.partialorder %v239, 0.0004427343
    %v241 = vsel %vm240, %v238, %v235
    %v242 = vadd.f32 %v155, 1.0
    %v243 = vlog2.pop %v242
    %v244 = vmul.f32 %v243, 0.6931472
    %v245 = vmul.f32 -0.5, %v155
    %v246 = vadd.f32 %v245, 1.0
    %v247 = vmul.f32 %v246, %v155
    %v248 = vand.u32 2147483647, %v155
    %vm249 = vcmp.lt.f32.partialorder %v248, 0.0004427343
    %v250 = vsel %vm249, %v247, %v244
    %v251 = vadd.f32 %v157, 1.0
    %v252 = vlog2.pop %v251
    %v253 = vmul.f32 %v252, 0.6931472
    %v254 = vmul.f32 -0.5, %v157
    %v255 = vadd.f32 %v254, 1.0
    %v256 = vmul.f32 %v255, %v157
    %v257 = vand.u32 2147483647, %v157
    %vm258 = vcmp.lt.f32.partialorder %v257, 0.0004427343
    %v259 = vsel %vm258, %v256, %v253
    %v260 = vadd.f32 %v159, 1.0
    %v261 = vlog2.pop %v260
    %v262 = vmul.f32 %v261, 0.6931472
    %v263 = vmul.f32 -0.5, %v159
    %v264 = vadd.f32 %v263, 1.0
    %v265 = vmul.f32 %v264, %v159
    %v266 = vand.u32 2147483647, %v159
    %vm267 = vcmp.lt.f32.partialorder %v266, 0.0004427343
    %v268 = vsel %vm267, %v265, %v262
    %v269 = vadd.f32 %v161, 1.0
    %v270 = vlog2.pop %v269
    %v271 = vmul.f32 %v270, 0.6931472
    %v272 = vmul.f32 -0.5, %v161
    %v273 = vadd.f32 %v272, 1.0
    %v274 = vmul.f32 %v273, %v161
    %v275 = vand.u32 2147483647, %v161
    %vm276 = vcmp.lt.f32.partialorder %v275, 0.0004427343
    %v277 = vsel %vm276, %v274, %v271
    %v278 = vadd.f32 %v163, 1.0
    %v279 = vlog2.pop %v278
    %v280 = vmul.f32 %v279, 0.6931472
    %v281 = vmul.f32 -0.5, %v163
    %v282 = vadd.f32 %v281, 1.0
    %v283 = vmul.f32 %v282, %v163
    %v284 = vand.u32 2147483647, %v163
    %vm285 = vcmp.lt.f32.partialorder %v284, 0.0004427343
    %v286 = vsel %vm285, %v283, %v280
    %v287 = vadd.f32 %v165, 1.0
    %v288 = vlog2.pop %v287
    %v289 = vmul.f32 %v288, 0.6931472
    %v290 = vmul.f32 -0.5, %v165
    %v291 = vadd.f32 %v290, 1.0
    %v292 = vmul.f32 %v291, %v165
    %v293 = vand.u32 2147483647, %v165
    %vm294 = vcmp.lt.f32.partialorder %v293, 0.0004427343
    %v295 = vsel %vm294, %v292, %v289
    %v296 = vadd.f32 %v167, 1.0
    %v297 = vlog2.pop %v296
    %v298 = vmul.f32 %v297, 0.6931472
    %v299 = vmul.f32 -0.5, %v167
    %v300 = vadd.f32 %v299, 1.0
    %v301 = vmul.f32 %v300, %v167
    %v302 = vand.u32 2147483647, %v167
    %vm303 = vcmp.lt.f32.partialorder %v302, 0.0004427343
    %v304 = vsel %vm303, %v301, %v298
    %v305 = vadd.f32 %v169, 1.0
    %v306 = vlog2.pop %v305
    %v307 = vmul.f32 %v306, 0.6931472
    %v308 = vmul.f32 -0.5, %v169
    %v309 = vadd.f32 %v308, 1.0
    %v310 = vmul.f32 %v309, %v169
    %v311 = vand.u32 2147483647, %v169
    %vm312 = vcmp.lt.f32.partialorder %v311, 0.0004427343
    %v313 = vsel %vm312, %v310, %v307
    %v314 = vadd.f32 %v90, %v178
    %v315 = vadd.f32 %v91, %v187
    %v316 = vadd.f32 %v92, %v196
    %v317 = vadd.f32 %v93, %v205
    %v318 = vadd.f32 %v94, %v214
    %v319 = vadd.f32 %v95, %v223
    %v320 = vadd.f32 %v96, %v232
    %v321 = vadd.f32 %v97, %v241
    %v322 = vadd.f32 %v98, %v250
    %v323 = vadd.f32 %v99, %v259
    %v324 = vadd.f32 %v100, %v268
    %v325 = vadd.f32 %v101, %v277
    %v326 = vadd.f32 %v102, %v286
    %v327 = vadd.f32 %v103, %v295
    %v328 = vadd.f32 %v104, %v304
    %v329 = vadd.f32 %v105, %v313
    %v330 = vadd.f32 %v314, 1e-08
    %v331 = vadd.f32 %v315, 1e-08
    %v332 = vadd.f32 %v316, 1e-08
    %v333 = vadd.f32 %v317, 1e-08
    %v334 = vadd.f32 %v318, 1e-08
    %v335 = vadd.f32 %v319, 1e-08
    %v336 = vadd.f32 %v320, 1e-08
    %v337 = vadd.f32 %v321, 1e-08
    %v338 = vadd.f32 %v322, 1e-08
    %v339 = vadd.f32 %v323, 1e-08
    %v340 = vadd.f32 %v324, 1e-08
    %v341 = vadd.f32 %v325, 1e-08
    %v342 = vadd.f32 %v326, 1e-08
    %v343 = vadd.f32 %v327, 1e-08
    %v344 = vadd.f32 %v328, 1e-08
    %v345 = vadd.f32 %v329, 1e-08
    %v346 = vld [vmem:[#allocation2] sm:$0xff]
    %v347 = vld [vmem:[#allocation2 + $0x8] sm:$0xff]
    %v348 = vld [vmem:[#allocation2 + $0x10] sm:$0xff]
    %v349 = vld [vmem:[#allocation2 + $0x18] sm:$0xff]
    %v350 = vld [vmem:[#allocation2 + $0x20] sm:$0xff]
    %v351 = vld [vmem:[#allocation2 + $0x28] sm:$0xff]
    %v352 = vld [vmem:[#allocation2 + $0x30] sm:$0xff]
    %v353 = vld [vmem:[#allocation2 + $0x38] sm:$0xff]
    %v354 = vld [vmem:[#allocation2 + $0x40] sm:$0xff]
    %v355 = vld [vmem:[#allocation2 + $0x48] sm:$0xff]
    %v356 = vld [vmem:[#allocation2 + $0x50] sm:$0xff]
    %v357 = vld [vmem:[#allocation2 + $0x58] sm:$0xff]
    %v358 = vld [vmem:[#allocation2 + $0x60] sm:$0xff]
    %v359 = vld [vmem:[#allocation2 + $0x68] sm:$0xff]
    %v360 = vld [vmem:[#allocation2 + $0x70] sm:$0xff]
    %v361 = vld [vmem:[#allocation2 + $0x78] sm:$0xff]
    %v362 = vld [vmem:[#allocation7] sm:$0xff]
    %v363 = vld [vmem:[#allocation7 + $0x8] sm:$0xff]
    %v364 = vld [vmem:[#allocation7 + $0x10] sm:$0xff]
    %v365 = vld [vmem:[#allocation7 + $0x18] sm:$0xff]
    %v366 = vld [vmem:[#allocation7 + $0x20] sm:$0xff]
    %v367 = vld [vmem:[#allocation7 + $0x28] sm:$0xff]
    %v368 = vld [vmem:[#allocation7 + $0x30] sm:$0xff]
    %v369 = vld [vmem:[#allocation7 + $0x38] sm:$0xff]
    %v370 = vld [vmem:[#allocation7 + $0x40] sm:$0xff]
    %v371 = vld [vmem:[#allocation7 + $0x48] sm:$0xff]
    %v372 = vld [vmem:[#allocation7 + $0x50] sm:$0xff]
    %v373 = vld [vmem:[#allocation7 + $0x58] sm:$0xff]
    %v374 = vld [vmem:[#allocation7 + $0x60] sm:$0xff]
    %v375 = vld [vmem:[#allocation7 + $0x68] sm:$0xff]
    %v376 = vld [vmem:[#allocation7 + $0x70] sm:$0xff]
    %v377 = vld [vmem:[#allocation7 + $0x78] sm:$0xff]
    %v378 = vmul.f32 %v330, %v362
    %v379 = vmul.f32 %v331, %v363
    %v380 = vmul.f32 %v332, %v364
    %v381 = vmul.f32 %v333, %v365
    %v382 = vmul.f32 %v334, %v366
    %v383 = vmul.f32 %v335, %v367
    %v384 = vmul.f32 %v336, %v368
    %v385 = vmul.f32 %v337, %v369
    %v386 = vmul.f32 %v338, %v370
    %v387 = vmul.f32 %v339, %v371
    %v388 = vmul.f32 %v340, %v372
    %v389 = vmul.f32 %v341, %v373
    %v390 = vmul.f32 %v342, %v374
    %v391 = vmul.f32 %v343, %v375
    %v392 = vmul.f32 %v344, %v376
    %v393 = vmul.f32 %v345, %v377
    %v394 = vadd.f32 %v346, %v378
    %v395 = vadd.f32 %v347, %v379
    %v396 = vadd.f32 %v348, %v380
    %v397 = vadd.f32 %v349, %v381
    %v398 = vadd.f32 %v350, %v382
    %v399 = vadd.f32 %v351, %v383
    %v400 = vadd.f32 %v352, %v384
    %v401 = vadd.f32 %v353, %v385
    %v402 = vadd.f32 %v354, %v386
    %v403 = vadd.f32 %v355, %v387
    %v404 = vadd.f32 %v356, %v388
    %v405 = vadd.f32 %v357, %v389
    %v406 = vadd.f32 %v358, %v390
    %v407 = vadd.f32 %v359, %v391
    %v408 = vadd.f32 %v360, %v392
    %v409 = vadd.f32 %v361, %v393
    %410 = vst [vmem:[#allocation8] sm:$0xff] %v394
    %411 = vst [vmem:[#allocation8 + $0x8] sm:$0xff] %v395
    %412 = vst [vmem:[#allocation8 + $0x10] sm:$0xff] %v396
    %413 = vst [vmem:[#allocation8 + $0x18] sm:$0xff] %v397
    %414 = vst [vmem:[#allocation8 + $0x20] sm:$0xff] %v398
    %415 = vst [vmem:[#allocation8 + $0x28] sm:$0xff] %v399
    %416 = vst [vmem:[#allocation8 + $0x30] sm:$0xff] %v400
    %417 = vst [vmem:[#allocation8 + $0x38] sm:$0xff] %v401
    %418 = vst [vmem:[#allocation8 + $0x40] sm:$0xff] %v402
    %419 = vst [vmem:[#allocation8 + $0x48] sm:$0xff] %v403
    %420 = vst [vmem:[#allocation8 + $0x50] sm:$0xff] %v404
    %421 = vst [vmem:[#allocation8 + $0x58] sm:$0xff] %v405
    %422 = vst [vmem:[#allocation8 + $0x60] sm:$0xff] %v406
    %423 = vst [vmem:[#allocation8 + $0x68] sm:$0xff] %v407
    %424 = vst [vmem:[#allocation8 + $0x70] sm:$0xff] %v408
    %425 = vst [vmem:[#allocation8 + $0x78] sm:$0xff] %v409
    %p426 = scmp.eq.s32.totalorder 0, 0
    // Predicated region
    $region38: #{tpu_custom_call.1} parent=1 // pred_check
      %p427 = pneg %p426
    $region39: #{tpu_custom_call.1} parent=1 // pred_check_branch
      %429 = sbr.rel (%p427) target = $region41
    $region40: #{tpu_custom_call.1} parent=1 // pred_region
      %v430 = vld [vmem:[%s4] sm:$0x1]
      %v431 = vmax.f32 %v430, 0.0
      %v432 = vand.u32 2147483647, %v430
      %v433 = vsub.f32 0.0, %v432
      %v434 = vmul.f32 %v433, 1.442695
      %v435 = vpow.pop %v434
      %v436 = vadd.f32 %v435, 1.0
      %v437 = vlog2.pop %v436
      %v438 = vmul.f32 %v437, 0.6931472
      %v439 = vmul.f32 -0.5, %v435
      %v440 = vadd.f32 %v439, 1.0
      %v441 = vmul.f32 %v440, %v435
      %v442 = vand.u32 2147483647, %v435
      %vm443 = vcmp.lt.f32.partialorder %v442, 0.0004427343
      %v444 = vsel %vm443, %v441, %v438
      %v445 = vadd.f32 %v431, %v444
      %v446 = vadd.f32 %v445, 1e-08
      %v447 = vld [vmem:[%s3] sm:$0x1]
      %v448 = vld [vmem:[%s5] sm:$0x1]
      %v449 = vmul.f32 %v446, %v448
      %v450 = vadd.f32 %v447, %v449
      %451 = vst [vmem:[#allocation9] sm:$0x1] %v450
    $region41: #{tpu_custom_call.1} parent=1 // pred_fallthru
      _
    // Predicated region
    $region42: #{tpu_custom_call.1} parent=1 // pred_check
      _
    $region43: #{tpu_custom_call.1} parent=1 // pred_check_branch
      %453 = sbr.rel (0) target = $region45
    $region44: #{tpu_custom_call.1} parent=1 // pred_region
      %455 = vsyncadd [#allocation4], 0
      %s456 = sshll.u32 [#allocation8], 4
      %s457 = int_to_ptr.vmem [resolvable:$true] %s456
      %s458 = sshll.u32 %s6, 4
      %s459 = int_to_ptr.hbm [resolvable:$true] %s458
      %464 = dma.vmem_to_hbm [thread:$0]  %s457, 2048, %s459, [#allocation4], 128, 128, 8
    $region45: #{tpu_custom_call.1} parent=1 // pred_fallthru
      _
    // Predicated region
    $region46: #{tpu_custom_call.1} parent=1 // pred_check
      _
    $region47: #{tpu_custom_call.1} parent=1 // pred_check_branch
      %466 = sbr.rel (0) target = $region49
    $region48: #{tpu_custom_call.1} parent=1 // pred_region
      %468 = vsyncadd [#allocation10], 0
      %s470 = sshll.u32 [#allocation9], 4
      %s471 = int_to_ptr.vmem [resolvable:$true] %s470
      %s472 = sshll.u32 %s7, 4
      %s473 = int_to_ptr.hbm [resolvable:$true] %s472
      %475 = dma.vmem_to_hbm [thread:$0]  %s471, 16, %s473, [#allocation10]
    $region49: #{tpu_custom_call.1} parent=1 // pred_fallthru
      _
    // Predicated region
    $region50: #{tpu_custom_call.1} parent=1 // pred_check
      _
    $region51: #{tpu_custom_call.1} parent=1 // pred_check_branch
      %477 = sbr.rel (0) target = $region53
    $region52: #{tpu_custom_call.1} parent=1 // pred_region
      %479 = dma.done [#allocation4], 2048
    $region53: #{tpu_custom_call.1} parent=1 // pred_fallthru
      _
    // Predicated region
    $region54: #{tpu_custom_call.1} parent=1 // pred_check
      _
    $region55: #{tpu_custom_call.1} parent=1 // pred_check_branch
      %481 = sbr.rel (0) target = $region57
    $region56: #{tpu_custom_call.1} parent=1 // pred_region
      %483 = dma.done [#allocation10], 16
    $region57: #{tpu_custom_call.1} parent=1 // pred_fallthru
      _
    %484 = vsyncpa [#allocation3], 1
    %485 = vsyncpa [#allocation6], 1
    %486 = vsyncpa [#allocation4], 1
    %487 = vsyncpa [#allocation10], 1

</llo_original>
